<compile_context>
chip_gen: v7x
topology: tpu7x:2x2x1
jax: 0.10.0
libtpu: 0.0.40
codegen_flags: <defaults>
</compile_context>

<pallas_src>
import functools

import jax
import jax.numpy as jnp
from jax.experimental import pallas as pl
from jax.experimental.pallas import tpu as pltpu


def _round_up(a, b):
    return (a + b - 1) // b * b


def _cdiv(a, b):
    return (a + b - 1) // b


def _pad_dim(n):
    """Lane/MXU-friendly padding: >=128, 256-aligned once past 128."""
    return _round_up(n, 128) if n <= 128 else _round_up(n, 256)


def _vmem_capacity_bytes():
    try:
        return int(pltpu.get_tpu_info().vmem_capacity_bytes)
    except Exception:
        return 64 * 1024 * 1024  # conservative fallback (v7x per-TC VMEM)


def _vmem_need_bytes(tm, th, Dp, x_itm, w_itm):
    # Double-buffered pipeline tiles.
    pipelined = (2 * tm * Dp * x_itm          # x tile
                 + 2 * 2 * Dp * th * w_itm    # w1 + w3 chunks
                 + 2 * th * Dp * w_itm        # w2 chunk
                 + 2 * tm * Dp * x_itm)       # output tile
    scratch = tm * Dp * 4                     # f32 accumulator
    interm = (3 * tm * th + tm * Dp) * 4      # h1, h3, gated, partial (f32)
    return pipelined + scratch + interm


def _ffn_kernel(x_ref, w1_ref, w3_ref, w2_ref, o_ref, acc_ref):
    """One (token-tile, hidden-chunk) step of the SwiGLU FFN.

    x_ref  : (tm, Dp)      token tile (resident across the hidden axis)
    w1_ref : (Dp, tH)      gate-projection chunk
    w3_ref : (Dp, tH)      value-projection chunk
    w2_ref : (tH, Dp)      down-projection chunk
    o_ref  : (tm, Dp)      output tile (written on the last hidden chunk)
    acc_ref: (tm, Dp) f32  VMEM accumulator
    """
    h_idx = pl.program_id(1)
    is_last = h_idx == pl.num_programs(1) - 1

    x = x_ref[...]
    h1 = jnp.dot(x, w1_ref[...], preferred_element_type=jnp.float32)
    h3 = jnp.dot(x, w3_ref[...], preferred_element_type=jnp.float32)
    gated = (h1 * jax.nn.sigmoid(h1)) * h3            # silu(x@w1) * (x@w3)

    partial = jnp.dot(gated.astype(w2_ref.dtype), w2_ref[...],
                      preferred_element_type=jnp.float32)

    @pl.when(h_idx == 0)
    def _():
        acc_ref[...] = jnp.zeros_like(acc_ref)

    @pl.when(jnp.logical_not(is_last))
    def _():
        acc_ref[...] += partial

    @pl.when(is_last)
    def _():
        # Fuse the final partial into the store: no acc RMW + reload.
        o_ref[...] = (acc_ref[...] + partial).astype(o_ref.dtype)


def prepare_ffn_weights(w1, w3, w2):
    """Pad weights ONCE at parameter-init time (outside the per-call jit).

    w1, w3: (D, H)  transposed nn.Linear(dim, hidden, bias=False) weights.
    w2    : (H, D)  transposed nn.Linear(hidden, dim, bias=False) weight.
    """
    D, H = w1.shape
    Dp, Hp = _pad_dim(D), _pad_dim(H)
    w1p = jnp.pad(w1, ((0, Dp - D), (0, Hp - H)))
    w3p = jnp.pad(w3, ((0, Dp - D), (0, Hp - H)))
    w2p = jnp.pad(w2, ((0, Hp - H), (0, Dp - D)))
    return w1p, w3p, w2p


@functools.partial(jax.jit, static_argnames=("tm", "th"))
def feed_forward(x, w1, w3, w2, *, tm=512, th=256):
    """SwiGLU FFN: w2( silu(x @ w1) * (x @ w3) ).  x: (..., D).

    Pass weights through prepare_ffn_weights() so the per-call path does no
    weight padding/copying (the pads below become zero-width no-ops).
    tm: token tile (raise for prefill/training shapes; v6e bf16 likes 640-768).
    th: hidden-dim chunk streamed per grid step.
    """
    orig_shape = x.shape
    D = orig_shape[-1]
    Din, H = w1.shape
    xt = x.reshape(-1, D)
    T = xt.shape[0]

    # Weight padding: no-op when prepare_ffn_weights() was used.
    Dp, Hp = _pad_dim(Din), _pad_dim(H)
    w1p = jnp.pad(w1, ((0, Dp - Din), (0, Hp - H)))
    w3p = jnp.pad(w3, ((0, Dp - Din), (0, Hp - H)))
    w2p = jnp.pad(w2, ((0, Hp - H), (0, Dp - Din)))

    x_itm = x.dtype.itemsize
    w_itm = w1.dtype.itemsize
    sub = 16 if x.dtype == jnp.bfloat16 else 8

    # Balanced token tiles: keep tiles as large as possible (AI lever) without
    # a nearly-empty padded trailing tile that re-streams all weights.
    n_tok_tiles = max(1, _cdiv(T, tm))
    tm_eff = min(_round_up(_cdiv(T, n_tok_tiles), sub), _round_up(T, sub))

    # Hidden chunk: a multiple of 128 that divides Hp (no per-call re-pad).
    cands = [c for c in range(128, min(th, Hp) + 1, 128) if Hp % c == 0]
    if not cands:
        cands = [128] if Hp % 128 == 0 else [Hp]
    cands.sort(reverse=True)

    # Fit the working set into this chip's VMEM: shrink th first, tm last.
    budget = int(0.85 * _vmem_capacity_bytes())
    th_eff = cands[0]
    for c in cands:
        th_eff = c
        if _vmem_need_bytes(tm_eff, th_eff, Dp, x_itm, w_itm) <= budget:
            break
    while (_vmem_need_bytes(tm_eff, th_eff, Dp, x_itm, w_itm) > budget
           and tm_eff > max(sub, 256)):
        tm_eff = max(sub, _round_up(tm_eff // 2, sub))

    Tp = _round_up(T, tm_eff)
    n_m = Tp // tm_eff
    n_h = Hp // th_eff

    xt = jnp.pad(xt, ((0, Tp - T), (0, Dp - D)))

    need = _vmem_need_bytes(tm_eff, th_eff, Dp, x_itm, w_itm)
    vmem_limit = int(min(budget, max(32 * 1024 * 1024, int(need * 1.25))))

    # Weights are re-streamed from HBM once per token tile.
    weight_bytes = (2 * Dp * Hp + Hp * Dp) * w_itm
    cost = pl.CostEstimate(
        flops=6 * Tp * Dp * Hp,
        transcendentals=Tp * Hp,
        bytes_accessed=2 * Tp * Dp * x_itm + n_m * weight_bytes,
    )

    # TODO(synk): for single-token-tile (decode) shapes on v7x, split the
    # hidden-chunk axis across the two TensorCores (per-core partial
    # accumulators combined at the end) so both cores contribute.

    out = pl.pallas_call(
        _ffn_kernel,
        out_shape=jax.ShapeDtypeStruct((Tp, Dp), x.dtype),
        grid_spec=pltpu.PrefetchScalarGridSpec(
            num_scalar_prefetch=0,
            grid=(n_m, n_h),
            in_specs=[
                pl.BlockSpec((tm_eff, Dp), lambda i, h: (i, 0)),   # x tile
                pl.BlockSpec((Dp, th_eff), lambda i, h: (0, h)),   # w1 chunk
                pl.BlockSpec((Dp, th_eff), lambda i, h: (0, h)),   # w3 chunk
                pl.BlockSpec((th_eff, Dp), lambda i, h: (h, 0)),   # w2 chunk
            ],
            out_specs=pl.BlockSpec((tm_eff, Dp), lambda i, h: (i, 0)),
            scratch_shapes=[pltpu.VMEM((tm_eff, Dp), jnp.float32)],
        ),
        compiler_params=pltpu.CompilerParams(
            dimension_semantics=("parallel", "arbitrary"),
            vmem_limit_bytes=vmem_limit),
        cost_estimate=cost,
    )(xt, w1p, w3p, w2p)

    return out[:T, :D].reshape(orig_shape)


def _ffn_reference(x, w1, w3, w2):
    xf = x.astype(jnp.float32)
    h1 = xf @ w1.astype(jnp.float32)
    h3 = xf @ w3.astype(jnp.float32)
    swish = h1 * jax.nn.sigmoid(h1)
    return ((swish * h3) @ w2.astype(jnp.float32)).astype(x.dtype)


def _compute_hidden_dim(dim, multiple_of, ffn_dim_multiplier=None):
    hidden_dim = 4 * dim
    hidden_dim = int(2 * hidden_dim / 3)
    if ffn_dim_multiplier is not None:
        hidden_dim = int(ffn_dim_multiplier * hidden_dim)
    hidden_dim = multiple_of * ((hidden_dim + multiple_of - 1) // multiple_of)
    return hidden_dim


if __name__ == "__main__":
    # Small config consistent with the module's __init__ logic.
    dim = 64
    multiple_of = 32
    ffn_dim_multiplier = None
    hidden_dim = _compute_hidden_dim(dim, multiple_of, ffn_dim_multiplier)  # 192

    batch, seq = 2, 8

    key = jax.random.PRNGKey(0)
    kx, k1, k2, k3 = jax.random.split(key, 4)

    x = jax.random.normal(kx, (batch, seq, dim), dtype=jnp.float32)

    # nn.Linear(in, out, bias=False).weight is (out, in); we store the
    # transposed (in, out) layout so the kernel does x @ W directly.
    w1 = (jax.random.normal(k1, (dim, hidden_dim), dtype=jnp.float32)
          / jnp.sqrt(dim))
    w3 = (jax.random.normal(k3, (dim, hidden_dim), dtype=jnp.float32)
          / jnp.sqrt(dim))
    w2 = (jax.random.normal(k2, (hidden_dim, dim), dtype=jnp.float32)
          / jnp.sqrt(hidden_dim))

    # One-time parameter preparation (padding) outside the per-call jit.
    w1p, w3p, w2p = prepare_ffn_weights(w1, w3, w2)

    out = feed_forward(x, w1p, w3p, w2p)
    jax.block_until_ready(out)

    ref = _ffn_reference(x.reshape(-1, dim), w1, w3, w2).reshape(x.shape)
    assert out.shape == x.shape
    assert jnp.allclose(out, ref, atol=1e-3, rtol=1e-3), (
        float(jnp.max(jnp.abs(out - ref))))

    print("KERNEL_OK")
</pallas_src>

<mosaic_0001>
module attributes {stable_mosaic.version = 11 : i64} {
  func.func @_ffn_kernel(%arg0: i32, %arg1: i32, %arg2: memref<16x128xf32, #tpu.memory_space<vmem>>, %arg3: memref<128x256xf32, #tpu.memory_space<vmem>>, %arg4: memref<128x256xf32, #tpu.memory_space<vmem>>, %arg5: memref<256x128xf32, #tpu.memory_space<vmem>>, %arg6: memref<16x128xf32, #tpu.memory_space<vmem>>, %arg7: memref<16x128xf32, #tpu.memory_space<vmem>>) attributes {dimension_semantics = [#tpu.dimension_semantics<parallel>, #tpu.dimension_semantics<arbitrary>], iteration_bounds = array<i64: 1, 1>, scalar_prefetch = 0 : i64, scratch_operands = 1 : i64, tpu.core_type = #tpu.core_type<tc>, window_params = [{transform_indices = @transform_0, window_bounds = array<i64: 16, 128>}, {transform_indices = @transform_1, window_bounds = array<i64: 128, 256>}, {transform_indices = @transform_2, window_bounds = array<i64: 128, 256>}, {transform_indices = @transform_3, window_bounds = array<i64: 256, 128>}, {transform_indices = @transform_4, window_bounds = array<i64: 16, 128>}]} {
    %c0_i32 = arith.constant 0 : i32
    %0 = arith.cmpi eq, %arg1, %c0_i32 : i32
    %c0 = arith.constant 0 : index
    %c0_0 = arith.constant 0 : index
    %1 = vector.load %arg2[%c0, %c0_0] : memref<16x128xf32, #tpu.memory_space<vmem>>, vector<16x128xf32>
    %c0_1 = arith.constant 0 : index
    %c0_2 = arith.constant 0 : index
    %2 = vector.load %arg3[%c0_1, %c0_2] : memref<128x256xf32, #tpu.memory_space<vmem>>, vector<128x256xf32>
    %cst = arith.constant dense<0.000000e+00> : vector<16x256xf32>
    %3 = tpu.matmul %1, %2, %cst {dimension_numbers = #tpu.dot_dimension_numbers<[1], [0], [0], [1], [0, 0, 1, 1], [], []>} : vector<16x128xf32>, vector<128x256xf32>, vector<16x256xf32> -> vector<16x256xf32>
    %c0_3 = arith.constant 0 : index
    %c0_4 = arith.constant 0 : index
    %4 = vector.load %arg4[%c0_3, %c0_4] : memref<128x256xf32, #tpu.memory_space<vmem>>, vector<128x256xf32>
    %cst_5 = arith.constant dense<0.000000e+00> : vector<16x256xf32>
    %5 = tpu.matmul %1, %4, %cst_5 {dimension_numbers = #tpu.dot_dimension_numbers<[1], [0], [0], [1], [0, 0, 1, 1], [], []>} : vector<16x128xf32>, vector<128x256xf32>, vector<16x256xf32> -> vector<16x256xf32>
    %6 = arith.negf %3 : vector<16x256xf32>
    %7 = math.exp %6 : vector<16x256xf32>
    %cst_6 = arith.constant 1.000000e+00 : f32
    %8 = vector.broadcast %cst_6 : f32 to vector<16x256xf32>
    %9 = arith.addf %8, %7 : vector<16x256xf32>
    %10 = arith.divf %8, %9 : vector<16x256xf32>
    %11 = arith.mulf %3, %10 : vector<16x256xf32>
    %12 = arith.mulf %11, %5 : vector<16x256xf32>
    %c0_7 = arith.constant 0 : index
    %c0_8 = arith.constant 0 : index
    %13 = vector.load %arg5[%c0_7, %c0_8] : memref<256x128xf32, #tpu.memory_space<vmem>>, vector<256x128xf32>
    %cst_9 = arith.constant dense<0.000000e+00> : vector<16x128xf32>
    %14 = tpu.matmul %12, %13, %cst_9 {dimension_numbers = #tpu.dot_dimension_numbers<[1], [0], [0], [1], [0, 0, 1, 1], [], []>} : vector<16x256xf32>, vector<256x128xf32>, vector<16x128xf32> -> vector<16x128xf32>
    %c0_i32_10 = arith.constant 0 : i32
    %15 = arith.cmpi eq, %arg1, %c0_i32_10 : i32
    %16 = arith.extui %15 : i1 to i32
    %c0_i32_11 = arith.constant 0 : i32
    %17 = arith.cmpi ne, %16, %c0_i32_11 : i32
    scf.if %17 {
      %cst_14 = arith.constant 0.000000e+00 : f32
      %23 = vector.broadcast %cst_14 : f32 to vector<16x128xf32>
      %c0_15 = arith.constant 0 : index
      %c0_16 = arith.constant 0 : index
      %24 = vector.load %arg7[%c0_15, %c0_16] : memref<16x128xf32, #tpu.memory_space<vmem>>, vector<16x128xf32>
      tpu.vector_store %arg7[%c0_15, %c0_16], %23 {strides = array<i32>} : memref<16x128xf32, #tpu.memory_space<vmem>>, vector<16x128xf32>,
    } else {
    }
    %true = arith.constant true
    %18 = arith.xori %0, %true : i1
    %19 = arith.extui %18 : i1 to i32
    %c0_i32_12 = arith.constant 0 : i32
    %20 = arith.cmpi ne, %19, %c0_i32_12 : i32
    scf.if %20 {
      %c0_14 = arith.constant 0 : index
      %c0_15 = arith.constant 0 : index
      %23 = vector.load %arg7[%c0_14, %c0_15] : memref<16x128xf32, #tpu.memory_space<vmem>>, vector<16x128xf32>
      %24 = arith.addf %23, %14 : vector<16x128xf32>
      %c0_16 = arith.constant 0 : index
      %c0_17 = arith.constant 0 : index
      %25 = vector.load %arg7[%c0_16, %c0_17] : memref<16x128xf32, #tpu.memory_space<vmem>>, vector<16x128xf32>
      tpu.vector_store %arg7[%c0_16, %c0_17], %24 {strides = array<i32>} : memref<16x128xf32, #tpu.memory_space<vmem>>, vector<16x128xf32>,
    } else {
    }
    %21 = arith.extui %0 : i1 to i32
    %c0_i32_13 = arith.constant 0 : i32
    %22 = arith.cmpi ne, %21, %c0_i32_13 : i32
    scf.if %22 {
      %c0_14 = arith.constant 0 : index
      %c0_15 = arith.constant 0 : index
      %23 = vector.load %arg7[%c0_14, %c0_15] : memref<16x128xf32, #tpu.memory_space<vmem>>, vector<16x128xf32>
      %24 = arith.addf %23, %14 : vector<16x128xf32>
      %c0_16 = arith.constant 0 : index
      %c0_17 = arith.constant 0 : index
      %25 = vector.load %arg6[%c0_16, %c0_17] : memref<16x128xf32, #tpu.memory_space<vmem>>, vector<16x128xf32>
      tpu.vector_store %arg6[%c0_16, %c0_17], %24 {strides = array<i32>} : memref<16x128xf32, #tpu.memory_space<vmem>>, vector<16x128xf32>,
    } else {
    }
    return
  }
  func.func @transform_0(%arg0: i32, %arg1: i32) -> (i32, i32) {
    %c0_i32 = arith.constant 0 : i32
    %c0_i32_0 = arith.constant 0 : i32
    return %arg0, %c0_i32 : i32, i32
  }
  func.func @transform_1(%arg0: i32, %arg1: i32) -> (i32, i32) {
    %c0_i32 = arith.constant 0 : i32
    %c0_i32_0 = arith.constant 0 : i32
    return %c0_i32, %arg1 : i32, i32
  }
  func.func @transform_2(%arg0: i32, %arg1: i32) -> (i32, i32) {
    %c0_i32 = arith.constant 0 : i32
    %c0_i32_0 = arith.constant 0 : i32
    return %c0_i32, %arg1 : i32, i32
  }
  func.func @transform_3(%arg0: i32, %arg1: i32) -> (i32, i32) {
    %c0_i32 = arith.constant 0 : i32
    %c0_i32_0 = arith.constant 0 : i32
    return %arg1, %c0_i32 : i32, i32
  }
  func.func @transform_4(%arg0: i32, %arg1: i32) -> (i32, i32) {
    %c0_i32 = arith.constant 0 : i32
    %c0_i32_0 = arith.constant 0 : i32
    return %arg0, %c0_i32 : i32, i32
  }
}

</mosaic_0001>

<llo_original>
// kernel: feed_forward.1
$region0: #{feed_forward.1}
  #allocation0 [shape = 'u32[]', space=smem, size = 0x4, offset = 0x4, fixed_abs, tag = 'smem constant byte address 0x4 - core index']
  #allocation1 [shape = 'u32[144,128]{1,0:T(1,128)}', space=vmem, size = 0x12000, scoped, tag = 'internal scratch']
  #allocation2 [shape = 'f32[16,128]{1,0:T(8,128)}', space=vmem, size = 0x2000, scoped, tag = 'scratch operand']
  %s0 = inlined_call_operand.vmem [shape: f32[16,128], index: 0, kind: input, shape index: {}]
  %s1 = inlined_call_operand.hbm [shape: f32[128,256], index: 1, kind: input, shape index: {}]
  %s2 = inlined_call_operand.hbm [shape: f32[128,256], index: 2, kind: input, shape index: {}]
  %s3 = inlined_call_operand.hbm [shape: f32[256,128], index: 3, kind: input, shape index: {}]
  %s4 = inlined_call_operand.vmem [shape: f32[16,128], index: 4, kind: output, shape index: {}]
  %s5 = sld [smem:[#allocation0]]
  $region50: #{feed_forward.1} parent=0
    _
  %s7 = ssub.s32 1, %s5
  %s8 = scalar_select 0, %s7, %s5
  $region1: #{feed_forward.1} parent=0
    #allocation3 [shape = 'u8[131072]{0}', space=vmem, size = 0x20000, scoped, tag = 'input window, operand 1, single buffered']
    #allocation4 [shape = 's32[1]{0}', space=sflag, size = 0x4, scoped, tag = 'scoped memory for feed_forward.1']
    #allocation5 [shape = 'u8[131072]{0}', space=vmem, size = 0x20000, scoped, tag = 'input window, operand 2, single buffered']
    #allocation6 [shape = 's32[1]{0}', space=sflag, size = 0x4, scoped, tag = 'scoped memory for feed_forward.1']
    #allocation7 [shape = 'u8[131072]{0}', space=vmem, size = 0x20000, scoped, tag = 'input window, operand 3, single buffered']
    %9 = vsyncpa [#allocation4], 0
    %10 = vsyncpa [#allocation6], 0
    // Predicated region
    $region2: #{feed_forward.1} parent=1 // pred_check
      _
    $region3: #{feed_forward.1} parent=1 // pred_check_branch
      %12 = sbr.rel (0) target = $region5
    $region4: #{feed_forward.1} parent=1 // pred_region
      _
    $region5: #{feed_forward.1} parent=1 // pred_fallthru
      _
    // Predicated region
    $region6: #{feed_forward.1} parent=1 // pred_check
      _
    $region7: #{feed_forward.1} parent=1 // pred_check_branch
      %14 = sbr.rel (0) target = $region9
    $region8: #{feed_forward.1} parent=1 // pred_region
      %s16 = ssub.s32 4096, 4096
      %17 = vsyncadd [#allocation4], %s16
      %s18 = sshll.u32 [#allocation3], 4
      %s19 = int_to_ptr.vmem [resolvable:$true] %s18
      %24 = dma.hbm_to_vmem [thread:$0]  %s1, 4096, %s19, [#allocation4], 256, 256, 16
    $region9: #{feed_forward.1} parent=1 // pred_fallthru
      _
    // Predicated region
    $region10: #{feed_forward.1} parent=1 // pred_check
      _
    $region11: #{feed_forward.1} parent=1 // pred_check_branch
      %26 = sbr.rel (0) target = $region13
    $region12: #{feed_forward.1} parent=1 // pred_region
      %s28 = ssub.s32 4096, 4096
      %29 = vsyncadd [#allocation6], %s28
      %s30 = sshll.u32 [#allocation5], 4
      %s31 = int_to_ptr.vmem [resolvable:$true] %s30
      %36 = dma.hbm_to_vmem [thread:$0]  %s2, 4096, %s31, [#allocation6], 256, 256, 16
    $region13: #{feed_forward.1} parent=1 // pred_fallthru
      _
    // Predicated region
    $region14: #{feed_forward.1} parent=1 // pred_check
      _
    $region15: #{feed_forward.1} parent=1 // pred_check_branch
      %38 = sbr.rel (0) target = $region17
    $region16: #{feed_forward.1} parent=1 // pred_region
      %s40 = ssub.s32 4096, 4096
      %41 = vsyncadd [#allocation6], %s40
      %s42 = sshll.u32 [#allocation7], 4
      %s43 = int_to_ptr.vmem [resolvable:$true] %s42
      %48 = dma.hbm_to_vmem [thread:$0]  %s3, 4096, %s43, [#allocation6], 128, 128, 8
    $region17: #{feed_forward.1} parent=1 // pred_fallthru
      _
    // Predicated region
    $region18: #{feed_forward.1} parent=1 // pred_check
      _
    $region19: #{feed_forward.1} parent=1 // pred_check_branch
      %50 = sbr.rel (0) target = $region21
    $region20: #{feed_forward.1} parent=1 // pred_region
      %51 = dma.done [#allocation4], 4096
    $region21: #{feed_forward.1} parent=1 // pred_fallthru
      _
    // Predicated region
    $region22: #{feed_forward.1} parent=1 // pred_check
      _
    $region23: #{feed_forward.1} parent=1 // pred_check_branch
      %53 = sbr.rel (0) target = $region25
    $region24: #{feed_forward.1} parent=1 // pred_region
      %54 = dma.done [#allocation6], 4096
    $region25: #{feed_forward.1} parent=1 // pred_fallthru
      _
    // Predicated region
    $region26: #{feed_forward.1} parent=1 // pred_check
      _
    $region27: #{feed_forward.1} parent=1 // pred_check_branch
      %56 = sbr.rel (0) target = $region29
    $region28: #{feed_forward.1} parent=1 // pred_region
      %57 = dma.done [#allocation6], 4096
    $region29: #{feed_forward.1} parent=1 // pred_fallthru
      _
    %p58 = scmp.eq.s32.totalorder 0, 0
    %v59 = vld [vmem:[%s0] sm:$0xff]
    %v60 = vld [vmem:[%s0 + $0x8] sm:$0xff]
    %v61 = vld [vmem:[#allocation3] sm:$0xff]
    %v62 = vld [vmem:[#allocation3 + $0x8] sm:$0xff]
    %v63 = vld [vmem:[#allocation3 + $0x10] sm:$0xff]
    %v64 = vld [vmem:[#allocation3 + $0x18] sm:$0xff]
    %v65 = vld [vmem:[#allocation3 + $0x20] sm:$0xff]
    %v66 = vld [vmem:[#allocation3 + $0x28] sm:$0xff]
    %v67 = vld [vmem:[#allocation3 + $0x30] sm:$0xff]
    %v68 = vld [vmem:[#allocation3 + $0x38] sm:$0xff]
    %v69 = vld [vmem:[#allocation3 + $0x40] sm:$0xff]
    %v70 = vld [vmem:[#allocation3 + $0x48] sm:$0xff]
    %v71 = vld [vmem:[#allocation3 + $0x50] sm:$0xff]
    %v72 = vld [vmem:[#allocation3 + $0x58] sm:$0xff]
    %v73 = vld [vmem:[#allocation3 + $0x60] sm:$0xff]
    %v74 = vld [vmem:[#allocation3 + $0x68] sm:$0xff]
    %v75 = vld [vmem:[#allocation3 + $0x70] sm:$0xff]
    %v76 = vld [vmem:[#allocation3 + $0x78] sm:$0xff]
    %v77 = vld [vmem:[#allocation3 + $0x80] sm:$0xff]
    %v78 = vld [vmem:[#allocation3 + $0x88] sm:$0xff]
    %v79 = vld [vmem:[#allocation3 + $0x90] sm:$0xff]
    %v80 = vld [vmem:[#allocation3 + $0x98] sm:$0xff]
    %v81 = vld [vmem:[#allocation3 + $0xa0] sm:$0xff]
    %v82 = vld [vmem:[#allocation3 + $0xa8] sm:$0xff]
    %v83 = vld [vmem:[#allocation3 + $0xb0] sm:$0xff]
    %v84 = vld [vmem:[#allocation3 + $0xb8] sm:$0xff]
    %v85 = vld [vmem:[#allocation3 + $0xc0] sm:$0xff]
    %v86 = vld [vmem:[#allocation3 + $0xc8] sm:$0xff]
    %v87 = vld [vmem:[#allocation3 + $0xd0] sm:$0xff]
    %v88 = vld [vmem:[#allocation3 + $0xd8] sm:$0xff]
    %v89 = vld [vmem:[#allocation3 + $0xe0] sm:$0xff]
    %v90 = vld [vmem:[#allocation3 + $0xe8] sm:$0xff]
    %v91 = vld [vmem:[#allocation3 + $0xf0] sm:$0xff]
    %v92 = vld [vmem:[#allocation3 + $0xf8] sm:$0xff]
    %93 = vmatprep.subr.mxu0 %v62
    %94 = vmatpush1.msra.mxu0 %v61
    %95 = vmatprep.subr.mxu0 %v64
    %96 = vmatpush1.msra.mxu0 %v63
    %97 = vmatprep.subr.mxu0 %v66
    %98 = vmatpush1.msra.mxu0 %v65
    %99 = vmatprep.subr.mxu0 %v68
    %100 = vmatpush1.msra.mxu0 %v67
    %101 = vmatprep.subr.mxu0 %v70
    %102 = vmatpush1.msra.mxu0 %v69
    %103 = vmatprep.subr.mxu0 %v72
    %104 = vmatpush1.msra.mxu0 %v71
    %105 = vmatprep.subr.mxu0 %v74
    %106 = vmatpush1.msra.mxu0 %v73
    %107 = vmatprep.subr.mxu0 %v76
    %108 = vmatpush1.msra.mxu0 %v75
    %109 = vmatprep.subr.mxu0 %v78
    %110 = vmatpush1.msra.mxu0 %v77
    %111 = vmatprep.subr.mxu0 %v80
    %112 = vmatpush1.msra.mxu0 %v79
    %113 = vmatprep.subr.mxu0 %v82
    %114 = vmatpush1.msra.mxu0 %v81
    %115 = vmatprep.subr.mxu0 %v84
    %116 = vmatpush1.msra.mxu0 %v83
    %117 = vmatprep.subr.mxu0 %v86
    %118 = vmatpush1.msra.mxu0 %v85
    %119 = vmatprep.subr.mxu0 %v88
    %120 = vmatpush1.msra.mxu0 %v87
    %121 = vmatprep.subr.mxu0 %v90
    %122 = vmatpush1.msra.mxu0 %v89
    %123 = vmatprep.subr.mxu0 %v92
    %124 = vmatpush1.msra.mxu0 %v91
    %125 = vmatprep.subr.mxu0 0.0
    %126 = vmatpush1.msra.mxu0 0.0
    %127 = vmatprep.subr.mxu0 0.0
    %128 = vmatpush1.msra.mxu0 0.0
    %129 = vmatprep.subr.mxu0 0.0
    %130 = vmatpush1.msra.mxu0 0.0
    %131 = vmatprep.subr.mxu0 0.0
    %132 = vmatpush1.msra.mxu0 0.0
    %133 = vmatprep.subr.mxu0 0.0
    %134 = vmatpush1.msra.mxu0 0.0
    %135 = vmatprep.subr.mxu0 0.0
    %136 = vmatpush1.msra.mxu0 0.0
    %137 = vmatprep.subr.mxu0 0.0
    %138 = vmatpush1.msra.mxu0 0.0
    %139 = vmatprep.subr.mxu0 0.0
    %140 = vmatpush1.msra.mxu0 0.0
    %141 = vmatprep.subr.mxu0 0.0
    %142 = vmatpush1.msra.mxu0 0.0
    %143 = vmatprep.subr.mxu0 0.0
    %144 = vmatpush1.msra.mxu0 0.0
    %145 = vmatprep.subr.mxu0 0.0
    %146 = vmatpush1.msra.mxu0 0.0
    %147 = vmatprep.subr.mxu0 0.0
    %148 = vmatpush1.msra.mxu0 0.0
    %149 = vmatprep.subr.mxu0 0.0
    %150 = vmatpush1.msra.mxu0 0.0
    %151 = vmatprep.subr.mxu0 0.0
    %152 = vmatpush1.msra.mxu0 0.0
    %153 = vmatprep.subr.mxu0 0.0
    %154 = vmatpush1.msra.mxu0 0.0
    %155 = vmatprep.subr.mxu0 0.0
    %156 = vmatpush1.msra.mxu0 0.0
    %157 = vmatprep.mubr.f32.mxu0 0.0
    %158 = vmatmul.mubr.f32.gmra.mrb[0].mxu0 %v59
    %v159 = vpop.f32.mrb[0].mxu0
    %v160 = vadd.f32 0.0, %v159
    %v161 = vpop.f32.mrb[0].mxu0
    %v162 = vadd.f32 0.0, %v161
    %163 = vmatprep.mubr.f32.mxu0 0.0
    %164 = vmatmul.mubr.f32.gmra.mrb[0].mxu0 %v60
    %v165 = vpop.f32.mrb[0].mxu0
    %v166 = vadd.f32 0.0, %v165
    %v167 = vpop.f32.mrb[0].mxu0
    %v168 = vadd.f32 0.0, %v167
    %169 = vdwg.mxu0
    %v170 = vld [vmem:[#allocation5] sm:$0xff]
    %v171 = vld [vmem:[#allocation5 + $0x8] sm:$0xff]
    %v172 = vld [vmem:[#allocation5 + $0x10] sm:$0xff]
    %v173 = vld [vmem:[#allocation5 + $0x18] sm:$0xff]
    %v174 = vld [vmem:[#allocation5 + $0x20] sm:$0xff]
    %v175 = vld [vmem:[#allocation5 + $0x28] sm:$0xff]
    %v176 = vld [vmem:[#allocation5 + $0x30] sm:$0xff]
    %v177 = vld [vmem:[#allocation5 + $0x38] sm:$0xff]
    %v178 = vld [vmem:[#allocation5 + $0x40] sm:$0xff]
    %v179 = vld [vmem:[#allocation5 + $0x48] sm:$0xff]
    %v180 = vld [vmem:[#allocation5 + $0x50] sm:$0xff]
    %v181 = vld [vmem:[#allocation5 + $0x58] sm:$0xff]
    %v182 = vld [vmem:[#allocation5 + $0x60] sm:$0xff]
    %v183 = vld [vmem:[#allocation5 + $0x68] sm:$0xff]
    %v184 = vld [vmem:[#allocation5 + $0x70] sm:$0xff]
    %v185 = vld [vmem:[#allocation5 + $0x78] sm:$0xff]
    %v186 = vld [vmem:[#allocation5 + $0x80] sm:$0xff]
    %v187 = vld [vmem:[#allocation5 + $0x88] sm:$0xff]
    %v188 = vld [vmem:[#allocation5 + $0x90] sm:$0xff]
    %v189 = vld [vmem:[#allocation5 + $0x98] sm:$0xff]
    %v190 = vld [vmem:[#allocation5 + $0xa0] sm:$0xff]
    %v191 = vld [vmem:[#allocation5 + $0xa8] sm:$0xff]
    %v192 = vld [vmem:[#allocation5 + $0xb0] sm:$0xff]
    %v193 = vld [vmem:[#allocation5 + $0xb8] sm:$0xff]
    %v194 = vld [vmem:[#allocation5 + $0xc0] sm:$0xff]
    %v195 = vld [vmem:[#allocation5 + $0xc8] sm:$0xff]
    %v196 = vld [vmem:[#allocation5 + $0xd0] sm:$0xff]
    %v197 = vld [vmem:[#allocation5 + $0xd8] sm:$0xff]
    %v198 = vld [vmem:[#allocation5 + $0xe0] sm:$0xff]
    %v199 = vld [vmem:[#allocation5 + $0xe8] sm:$0xff]
    %v200 = vld [vmem:[#allocation5 + $0xf0] sm:$0xff]
    %v201 = vld [vmem:[#allocation5 + $0xf8] sm:$0xff]
    %202 = vmatprep.subr.mxu0 %v171
    %203 = vmatpush1.msra.mxu0 %v170
    %204 = vmatprep.subr.mxu0 %v173
    %205 = vmatpush1.msra.mxu0 %v172
    %206 = vmatprep.subr.mxu0 %v175
    %207 = vmatpush1.msra.mxu0 %v174
    %208 = vmatprep.subr.mxu0 %v177
    %209 = vmatpush1.msra.mxu0 %v176
    %210 = vmatprep.subr.mxu0 %v179
    %211 = vmatpush1.msra.mxu0 %v178
    %212 = vmatprep.subr.mxu0 %v181
    %213 = vmatpush1.msra.mxu0 %v180
    %214 = vmatprep.subr.mxu0 %v183
    %215 = vmatpush1.msra.mxu0 %v182
    %216 = vmatprep.subr.mxu0 %v185
    %217 = vmatpush1.msra.mxu0 %v184
    %218 = vmatprep.subr.mxu0 %v187
    %219 = vmatpush1.msra.mxu0 %v186
    %220 = vmatprep.subr.mxu0 %v189
    %221 = vmatpush1.msra.mxu0 %v188
    %222 = vmatprep.subr.mxu0 %v191
    %223 = vmatpush1.msra.mxu0 %v190
    %224 = vmatprep.subr.mxu0 %v193
    %225 = vmatpush1.msra.mxu0 %v192
    %226 = vmatprep.subr.mxu0 %v195
    %227 = vmatpush1.msra.mxu0 %v194
    %228 = vmatprep.subr.mxu0 %v197
    %229 = vmatpush1.msra.mxu0 %v196
    %230 = vmatprep.subr.mxu0 %v199
    %231 = vmatpush1.msra.mxu0 %v198
    %232 = vmatprep.subr.mxu0 %v201
    %233 = vmatpush1.msra.mxu0 %v200
    %234 = vmatprep.subr.mxu0 0.0
    %235 = vmatpush1.msra.mxu0 0.0
    %236 = vmatprep.subr.mxu0 0.0
    %237 = vmatpush1.msra.mxu0 0.0
    %238 = vmatprep.subr.mxu0 0.0
    %239 = vmatpush1.msra.mxu0 0.0
    %240 = vmatprep.subr.mxu0 0.0
    %241 = vmatpush1.msra.mxu0 0.0
    %242 = vmatprep.subr.mxu0 0.0
    %243 = vmatpush1.msra.mxu0 0.0
    %244 = vmatprep.subr.mxu0 0.0
    %245 = vmatpush1.msra.mxu0 0.0
    %246 = vmatprep.subr.mxu0 0.0
    %247 = vmatpush1.msra.mxu0 0.0
    %248 = vmatprep.subr.mxu0 0.0
    %249 = vmatpush1.msra.mxu0 0.0
    %250 = vmatprep.subr.mxu0 0.0
    %251 = vmatpush1.msra.mxu0 0.0
    %252 = vmatprep.subr.mxu0 0.0
    %253 = vmatpush1.msra.mxu0 0.0
    %254 = vmatprep.subr.mxu0 0.0
    %255 = vmatpush1.msra.mxu0 0.0
    %256 = vmatprep.subr.mxu0 0.0
    %257 = vmatpush1.msra.mxu0 0.0
    %258 = vmatprep.subr.mxu0 0.0
    %259 = vmatpush1.msra.mxu0 0.0
    %260 = vmatprep.subr.mxu0 0.0
    %261 = vmatpush1.msra.mxu0 0.0
    %262 = vmatprep.subr.mxu0 0.0
    %263 = vmatpush1.msra.mxu0 0.0
    %264 = vmatprep.subr.mxu0 0.0
    %265 = vmatpush1.msra.mxu0 0.0
    %266 = vmatprep.mubr.f32.mxu0 0.0
    %267 = vmatmul.mubr.f32.gmra.mrb[0].mxu0 %v59
    %v268 = vpop.f32.mrb[0].mxu0
    %v269 = vadd.f32 0.0, %v268
    %v270 = vpop.f32.mrb[0].mxu0
    %v271 = vadd.f32 0.0, %v270
    %272 = vmatprep.mubr.f32.mxu0 0.0
    %273 = vmatmul.mubr.f32.gmra.mrb[0].mxu0 %v60
    %v274 = vpop.f32.mrb[0].mxu0
    %v275 = vadd.f32 0.0, %v274
    %v276 = vpop.f32.mrb[0].mxu0
    %v277 = vadd.f32 0.0, %v276
    %278 = vdwg.mxu0
    %v279 = vxor.u32 %v160, 2147483648
    %v280 = vxor.u32 %v162, 2147483648
    %v281 = vxor.u32 %v166, 2147483648
    %v282 = vxor.u32 %v168, 2147483648
    %v283 = vmul.f32 %v279, 1.442695
    %v284 = vpow.pop %v283
    %v285 = vmul.f32 %v280, 1.442695
    %v286 = vpow.pop %v285
    %v287 = vmul.f32 %v281, 1.442695
    %v288 = vpow.pop %v287
    %v289 = vmul.f32 %v282, 1.442695
    %v290 = vpow.pop %v289
    %v291 = vadd.f32 %v284, 1.0
    %v292 = vadd.f32 %v286, 1.0
    %v293 = vadd.f32 %v288, 1.0
    %v294 = vadd.f32 %v290, 1.0
    %v295 = vrcp.pop %v291
    %v296 = vmul.f32 1.0, %v295
    %v297 = vrcp.pop %v292
    %v298 = vmul.f32 1.0, %v297
    %v299 = vrcp.pop %v293
    %v300 = vmul.f32 1.0, %v299
    %v301 = vrcp.pop %v294
    %v302 = vmul.f32 1.0, %v301
    %v303 = vmul.f32 %v160, %v296
    %v304 = vmul.f32 %v162, %v298
    %v305 = vmul.f32 %v166, %v300
    %v306 = vmul.f32 %v168, %v302
    %v307 = vmul.f32 %v303, %v269
    %v308 = vmul.f32 %v304, %v271
    %v309 = vmul.f32 %v305, %v275
    %v310 = vmul.f32 %v306, %v277
    %v311 = vld [vmem:[#allocation7] sm:$0xff]
    %v312 = vld [vmem:[#allocation7 + $0x8] sm:$0xff]
    %v313 = vld [vmem:[#allocation7 + $0x10] sm:$0xff]
    %v314 = vld [vmem:[#allocation7 + $0x18] sm:$0xff]
    %v315 = vld [vmem:[#allocation7 + $0x20] sm:$0xff]
    %v316 = vld [vmem:[#allocation7 + $0x28] sm:$0xff]
    %v317 = vld [vmem:[#allocation7 + $0x30] sm:$0xff]
    %v318 = vld [vmem:[#allocation7 + $0x38] sm:$0xff]
    %v319 = vld [vmem:[#allocation7 + $0x40] sm:$0xff]
    %v320 = vld [vmem:[#allocation7 + $0x48] sm:$0xff]
    %v321 = vld [vmem:[#allocation7 + $0x50] sm:$0xff]
    %v322 = vld [vmem:[#allocation7 + $0x58] sm:$0xff]
    %v323 = vld [vmem:[#allocation7 + $0x60] sm:$0xff]
    %v324 = vld [vmem:[#allocation7 + $0x68] sm:$0xff]
    %v325 = vld [vmem:[#allocation7 + $0x70] sm:$0xff]
    %v326 = vld [vmem:[#allocation7 + $0x78] sm:$0xff]
    %v327 = vld [vmem:[#allocation7 + $0x80] sm:$0xff]
    %v328 = vld [vmem:[#allocation7 + $0x88] sm:$0xff]
    %v329 = vld [vmem:[#allocation7 + $0x90] sm:$0xff]
    %v330 = vld [vmem:[#allocation7 + $0x98] sm:$0xff]
    %v331 = vld [vmem:[#allocation7 + $0xa0] sm:$0xff]
    %v332 = vld [vmem:[#allocation7 + $0xa8] sm:$0xff]
    %v333 = vld [vmem:[#allocation7 + $0xb0] sm:$0xff]
    %v334 = vld [vmem:[#allocation7 + $0xb8] sm:$0xff]
    %v335 = vld [vmem:[#allocation7 + $0xc0] sm:$0xff]
    %v336 = vld [vmem:[#allocation7 + $0xc8] sm:$0xff]
    %v337 = vld [vmem:[#allocation7 + $0xd0] sm:$0xff]
    %v338 = vld [vmem:[#allocation7 + $0xd8] sm:$0xff]
    %v339 = vld [vmem:[#allocation7 + $0xe0] sm:$0xff]
    %v340 = vld [vmem:[#allocation7 + $0xe8] sm:$0xff]
    %v341 = vld [vmem:[#allocation7 + $0xf0] sm:$0xff]
    %v342 = vld [vmem:[#allocation7 + $0xf8] sm:$0xff]
    %343 = vmatprep.subr.mxu0 0.0
    %344 = vmatpush1.msra.mxu0 %v311
    %345 = vmatprep.subr.mxu0 0.0
    %346 = vmatpush1.msra.mxu0 %v312
    %347 = vmatprep.subr.mxu0 0.0
    %348 = vmatpush1.msra.mxu0 %v313
    %349 = vmatprep.subr.mxu0 0.0
    %350 = vmatpush1.msra.mxu0 %v314
    %351 = vmatprep.subr.mxu0 0.0
    %352 = vmatpush1.msra.mxu0 %v315
    %353 = vmatprep.subr.mxu0 0.0
    %354 = vmatpush1.msra.mxu0 %v316
    %355 = vmatprep.subr.mxu0 0.0
    %356 = vmatpush1.msra.mxu0 %v317
    %357 = vmatprep.subr.mxu0 0.0
    %358 = vmatpush1.msra.mxu0 %v318
    %359 = vmatprep.subr.mxu0 0.0
    %360 = vmatpush1.msra.mxu0 %v319
    %361 = vmatprep.subr.mxu0 0.0
    %362 = vmatpush1.msra.mxu0 %v320
    %363 = vmatprep.subr.mxu0 0.0
    %364 = vmatpush1.msra.mxu0 %v321
    %365 = vmatprep.subr.mxu0 0.0
    %366 = vmatpush1.msra.mxu0 %v322
    %367 = vmatprep.subr.mxu0 0.0
    %368 = vmatpush1.msra.mxu0 %v323
    %369 = vmatprep.subr.mxu0 0.0
    %370 = vmatpush1.msra.mxu0 %v324
    %371 = vmatprep.subr.mxu0 0.0
    %372 = vmatpush1.msra.mxu0 %v325
    %373 = vmatprep.subr.mxu0 0.0
    %374 = vmatpush1.msra.mxu0 %v326
    %375 = vmatprep.subr.mxu0 0.0
    %376 = vmatpush1.msra.mxu0 %v327
    %377 = vmatprep.subr.mxu0 0.0
    %378 = vmatpush1.msra.mxu0 %v328
    %379 = vmatprep.subr.mxu0 0.0
    %380 = vmatpush1.msra.mxu0 %v329
    %381 = vmatprep.subr.mxu0 0.0
    %382 = vmatpush1.msra.mxu0 %v330
    %383 = vmatprep.subr.mxu0 0.0
    %384 = vmatpush1.msra.mxu0 %v331
    %385 = vmatprep.subr.mxu0 0.0
    %386 = vmatpush1.msra.mxu0 %v332
    %387 = vmatprep.subr.mxu0 0.0
    %388 = vmatpush1.msra.mxu0 %v333
    %389 = vmatprep.subr.mxu0 0.0
    %390 = vmatpush1.msra.mxu0 %v334
    %391 = vmatprep.subr.mxu0 0.0
    %392 = vmatpush1.msra.mxu0 %v335
    %393 = vmatprep.subr.mxu0 0.0
    %394 = vmatpush1.msra.mxu0 %v336
    %395 = vmatprep.subr.mxu0 0.0
    %396 = vmatpush1.msra.mxu0 %v337
    %397 = vmatprep.subr.mxu0 0.0
    %398 = vmatpush1.msra.mxu0 %v338
    %399 = vmatprep.subr.mxu0 0.0
    %400 = vmatpush1.msra.mxu0 %v339
    %401 = vmatprep.subr.mxu0 0.0
    %402 = vmatpush1.msra.mxu0 %v340
    %403 = vmatprep.subr.mxu0 0.0
    %404 = vmatpush1.msra.mxu0 %v341
    %405 = vmatprep.subr.mxu0 0.0
    %406 = vmatpush1.msra.mxu0 %v342
    %407 = vmatprep.mubr.f32.mxu0 %v308
    %408 = vmatmul.mubr.f32.gmra.mrb[0].mxu0 %v307
    %v409 = vpop.f32.mrb[0].mxu0
    %v410 = vadd.f32 0.0, %v409
    %v411 = vpop.f32.mrb[0].mxu0
    %412 = vmatprep.mubr.f32.mxu0 %v310
    %413 = vmatmul.mubr.f32.gmra.mrb[0].mxu0 %v309
    %v414 = vpop.f32.mrb[0].mxu0
    %v415 = vadd.f32 0.0, %v414
    %v416 = vpop.f32.mrb[0].mxu0
    %417 = vdwg.mxu0
    // Predicated region
    $region30: #{feed_forward.1} parent=1 // pred_check
      %p418 = pneg %p58
    $region31: #{feed_forward.1} parent=1 // pred_check_branch
      %420 = sbr.rel (%p418) target = $region33
    $region32: #{feed_forward.1} parent=1 // pred_region
      %421 = vst [vmem:[#allocation2] sm:$0xff] 0.0
      %422 = vst [vmem:[#allocation2 + $0x8] sm:$0xff] 0.0
    $region33: #{feed_forward.1} parent=1 // pred_fallthru
      _
    %p423 = scmp.ne.s32.totalorder 0, 0
    // Predicated region
    $region34: #{feed_forward.1} parent=1 // pred_check
      %p424 = pneg %p423
    $region35: #{feed_forward.1} parent=1 // pred_check_branch
      %426 = sbr.rel (%p424) target = $region37
    $region36: #{feed_forward.1} parent=1 // pred_region
      %v427 = vld [vmem:[#allocation2] sm:$0xff]
      %v428 = vld [vmem:[#allocation2 + $0x8] sm:$0xff]
      %v429 = vadd.f32 %v427, %v410
      %v430 = vadd.f32 %v428, %v415
      %431 = vst [vmem:[#allocation2] sm:$0xff] %v429
      %432 = vst [vmem:[#allocation2 + $0x8] sm:$0xff] %v430
    $region37: #{feed_forward.1} parent=1 // pred_fallthru
      _
    // Predicated region
    $region38: #{feed_forward.1} parent=1 // pred_check
      %p433 = pneg %p58
    $region39: #{feed_forward.1} parent=1 // pred_check_branch
      %435 = sbr.rel (%p433) target = $region41
    $region40: #{feed_forward.1} parent=1 // pred_region
      %v436 = vld [vmem:[#allocation2] sm:$0xff]
      %v437 = vld [vmem:[#allocation2 + $0x8] sm:$0xff]
      %v438 = vadd.f32 %v436, %v410
      %v439 = vadd.f32 %v437, %v415
      %440 = vst [vmem:[%s4] sm:$0xff] %v438
      %441 = vst [vmem:[%s4 + $0x8] sm:$0xff] %v439
    $region41: #{feed_forward.1} parent=1 // pred_fallthru
      _
    // Predicated region
    $region42: #{feed_forward.1} parent=1 // pred_check
      _
    $region43: #{feed_forward.1} parent=1 // pred_check_branch
      %443 = sbr.rel (0) target = $region45
    $region44: #{feed_forward.1} parent=1 // pred_region
      _
    $region45: #{feed_forward.1} parent=1 // pred_fallthru
      _
    // Predicated region
    $region46: #{feed_forward.1} parent=1 // pred_check
      _
    $region47: #{feed_forward.1} parent=1 // pred_check_branch
      %445 = sbr.rel (0) target = $region49
    $region48: #{feed_forward.1} parent=1 // pred_region
      _
    $region49: #{feed_forward.1} parent=1 // pred_fallthru
      _
    %446 = vsyncpa [#allocation4], 1
    %447 = vsyncpa [#allocation6], 1

</llo_original>
